<compile_context>
chip_gen: v5e
topology: v5e:2x2
jax: 0.10.0
libtpu: 0.0.40
codegen_flags: <defaults>
</compile_context>

<pallas_src>
import numpy as np
import jax
import jax.numpy as jnp
from jax.experimental import pallas as pl
from jax.experimental.pallas import tpu as pltpu


# ----------------------------------------------------------------------------
# Index helpers (identical geometry to the PyTorch reference)
# ----------------------------------------------------------------------------
def get_indices_of_pairs(radius, size):
    deltas = []
    for x in range(-radius, radius + 1):
        for y in range(-radius, radius + 1):
            if x * x + y * y < radius * radius and x + y != 0:
                deltas.append((x, y))
    h, w = size
    indices = np.reshape(np.arange(0, h * w, dtype=np.int64), (h, w))
    indices_from = indices[radius:-radius, radius:-radius].flatten()
    indices_to = []
    for dx, dy in deltas:
        start_x = radius + dx
        end_x = radius + (w - 2 * radius) + dx
        start_y = radius + dy
        end_y = radius + (h - 2 * radius) + dy
        indices_to.append(indices[start_y:end_y, start_x:end_x].flatten())
    indices_to = np.concatenate(indices_to, axis=0)
    return indices_from, indices_to


def get_pixel_locations(size):
    pixel_loc = np.zeros((2, size[0], size[1]))
    for i in range(size[0]):
        for j in range(size[1]):
            pixel_loc[0, i, j] = i
            pixel_loc[1, i, j] = j
    return pixel_loc


def get_pair_deltas(radius):
    """Neighbour offsets (dx = column shift, dy = row shift), same loop order
    as get_indices_of_pairs.  delta_hat = (dy, dx) per (row, col) channel."""
    deltas = []
    for x in range(-radius, radius + 1):
        for y in range(-radius, radius + 1):
            if x * x + y * y < radius * radius and x + y != 0:
                deltas.append((x, y))
    return deltas


# ----------------------------------------------------------------------------
# One-time probe of pltpu.roll's rotate direction (guards the column-shift
# logic against a semantics flip across jax/Mosaic versions; one tiny kernel).
# ----------------------------------------------------------------------------
_ROLL_MATCHES_JNP = None


def _roll_matches_jnp_roll():
    global _ROLL_MATCHES_JNP
    if _ROLL_MATCHES_JNP is None:
        def probe(x_ref, o_ref):
            o_ref[...] = pltpu.roll(x_ref[...], shift=1, axis=1)

        x = jax.lax.broadcasted_iota(jnp.float32, (8, 128), 1)
        y = pl.pallas_call(
            probe, out_shape=jax.ShapeDtypeStruct((8, 128), jnp.float32))(x)
        # jnp.roll semantics: out[i] = in[i - shift]  ->  out[0, 1] == 0.
        _ROLL_MATCHES_JNP = bool(np.asarray(y)[0, 1] == 0.0)
    return _ROLL_MATCHES_JNP


# ----------------------------------------------------------------------------
# Pallas kernel: one (batch, row-tile) per grid step.  All neighbour pairs are
# produced from VMEM scratch windows + lane rolls; no gathers, no big planes
# held in vregs.
# ----------------------------------------------------------------------------
def _make_ir_kernel(deltas, r, Hi, Wi, TR, W_pad, D, roll_sign):
    HALO = TR + 2 * r

    def kernel(df_ref, fg_ref, out_ref, ch0_s, ch1_s, sum_s):
        # df_ref : (C=2, H_pad, W_pad)  whole padded image (resident per batch)
        # fg_ref : (TR, W_pad)          fg mask at the tile's "from" rows
        # out_ref: (8, 128)             per-(batch, tile) partial sums
        # *_s    : (HALO, W_pad) f32    VMEM scratch: halo rows of ch0, ch1, ch0+ch1
        rt = pl.program_id(1)
        row0 = pl.multiple_of(rt * TR, 8)   # halo start row / interior row offset

        # Copy the tile's halo rows into scratch once; every neighbour view in
        # the delta loop below is a cheap static-offset reload from VMEM.
        c0 = df_ref[0, pl.ds(row0, HALO), :]
        c1 = df_ref[1, pl.ds(row0, HALO), :]
        ch0_s[...] = c0
        ch1_s[...] = c1
        sum_s[...] = c0 + c1

        # Features at the "from" pixels of this tile (rows r .. r+TR of halo).
        ff0 = ch0_s[r:r + TR, :]
        ff1 = ch1_s[r:r + TR, :]

        acc_abs = jnp.zeros((TR, W_pad), jnp.float32)  # sum_{c,d} |delta - delta_hat|
        ssum = jnp.zeros((TR, W_pad), jnp.float32)     # sum_d (ft0 + ft1)

        # Unrolled loop over the D neighbour offsets; per-iteration working set
        # is a handful of (TR, W_pad) planes -> fits the 64-entry vreg file.
        for dx, dy in deltas:
            ro = r + dy
            ft0 = ch0_s[ro:ro + TR, :]
            ft1 = ch1_s[ro:ro + TR, :]
            st = sum_s[ro:ro + TR, :]
            if dx != 0:
                sh = (roll_sign * (-dx)) % W_pad   # lane rotate rides the XLU slot
                ft0 = pltpu.roll(ft0, shift=sh, axis=1)
                ft1 = pltpu.roll(ft1, shift=sh, axis=1)
                st = pltpu.roll(st, shift=sh, axis=1)
            t0 = ft0 - ff0
            t1 = ft1 - ff1
            # NOTE: on v6e/v7x these subtract/abs ops could run in bf16 (f32
            # accumulate) for ~2x VALU throughput; kept f32 so the same kernel
            # is also correct/fast on v5e (no bf16 VPU path).
            a0 = jnp.abs(t0 - float(dy)) if dy != 0 else jnp.abs(t0)
            a1 = jnp.abs(t1 - float(dx)) if dx != 0 else jnp.abs(t1)
            acc_abs = acc_abs + (a0 + a1)
            ssum = ssum + st

        # sum_{c,d} delta = sum_d (ft0 + ft1) - D * (ff0 + ff1)
        acc_d = ssum - float(D) * (ff0 + ff1)

        # Interior-validity mask: kills padded rows of the last tile, padded
        # columns, and the non-interior columns introduced by full-width rolls.
        i_loc = jax.lax.broadcasted_iota(jnp.int32, (TR, W_pad), 0)
        j_loc = jax.lax.broadcasted_iota(jnp.int32, (TR, W_pad), 1)
        valid = ((row0 + i_loc) < Hi) & (j_loc >= r) & (j_loc < r + Wi)
        valid_f = valid.astype(jnp.float32)

        # TODO(synk): fg_label/bg_label are undefined in the reference forward();
        # here fg = (target > 0) at the "from" pixels, broadcast over C and D.
        fg_f = fg_ref[...] * valid_f
        bg_f = valid_f - fg_f

        p_fg = jnp.sum(fg_f * acc_abs)   # foreground L1 numerator
        p_bg = jnp.sum(bg_f * acc_d)     # background numerator (direct, no cancellation)
        p_cnt = jnp.sum(fg_f)            # foreground pixel count

        row = jax.lax.broadcasted_iota(jnp.int32, (8, 128), 0)
        out = jnp.where(row == 0, p_fg, 0.0)
        out = jnp.where(row == 1, p_bg, out)
        out = jnp.where(row == 2, p_cnt, out)
        out_ref[...] = out

    return kernel


# ----------------------------------------------------------------------------
# Wrapper (mirrors InterPixelRelationLoss.forward)
# ----------------------------------------------------------------------------
def inter_pixel_relation_loss(inputs, targets, pixel_radius=5):
    df, bd = inputs                      # bd unpacked but unused, as in the reference
    N, C, H, W = df.shape
    assert C == 2, "delta_hat has 2 channels; df must have C == 2"
    r = pixel_radius
    assert H > 2 * r and W > 2 * r, "spatial dims must exceed 2 * pixel_radius"
    Hi, Wi = H - 2 * r, W - 2 * r
    deltas = get_pair_deltas(r)
    D = len(deltas)
    F_ = Hi * Wi

    # ---- lane-dense layout: pad W to a multiple of 128, rows to the tile grid
    LANES = 128
    W_pad = pl.cdiv(W, LANES) * LANES
    # Row-tile size: ~4 vregs per f32 plane so the unrolled delta loop fits the
    # vreg file; never below the (8, 128) sublane granule.
    TR = max(8, min(((4096 // W_pad) // 8) * 8, pl.cdiv(Hi, 8) * 8))
    num_rt = pl.cdiv(Hi, TR)
    R_pad = num_rt * TR
    H_pad = R_pad + 2 * r
    HALO = TR + 2 * r

    df_p = jnp.pad(df.astype(jnp.float32),
                   ((0, 0), (0, 0), (0, H_pad - H), (0, W_pad - W)))

    # fg mask at "from" pixels, indexed by (interior row, global column).
    tgt = targets.reshape(N, H, W)
    fg = (tgt[:, r:r + Hi, :] > 0).astype(jnp.float32)
    fg = jnp.pad(fg, ((0, 0), (0, R_pad - Hi), (0, W_pad - W)))

    # ---- VMEM budget: inputs/outputs are double-buffered; cap at 7/8 of the
    # device VMEM (<= 56 MiB on v7x, up to ~112 MiB on v5e/v6e).
    need = (2 * (C * H_pad * W_pad * 4 + TR * W_pad * 4 + 8 * 128 * 4)
            + 3 * HALO * W_pad * 4)
    try:
        vmem_cap = int(pltpu.get_tpu_info().vmem_capacity_bytes)
    except Exception:
        vmem_cap = 64 * 1024 * 1024      # conservative fallback (v7x per-core VMEM)
    vmem_limit = int(min(max(need + (4 << 20), 32 << 20), (vmem_cap * 7) // 8))

    roll_sign = 1 if _roll_matches_jnp_roll() else -1
    kernel = _make_ir_kernel(tuple(deltas), r, Hi, Wi, TR, W_pad, D, roll_sign)

    partials = pl.pallas_call(
        kernel,
        out_shape=jax.ShapeDtypeStruct((N, num_rt, 8, 128), jnp.float32),
        grid=(N, num_rt),
        in_specs=[
            # Whole padded image per batch; the block index is constant along
            # the row-tile axis so it is DMA'd once per batch and re-used.
            pl.BlockSpec((None, C, H_pad, W_pad), lambda n, t: (n, 0, 0, 0)),
            pl.BlockSpec((None, TR, W_pad), lambda n, t: (n, t, 0)),
        ],
        out_specs=pl.BlockSpec((None, None, 8, 128), lambda n, t: (n, t, 0, 0)),
        scratch_shapes=[
            pltpu.VMEM((HALO, W_pad), jnp.float32),   # channel 0 halo rows
            pltpu.VMEM((HALO, W_pad), jnp.float32),   # channel 1 halo rows
            pltpu.VMEM((HALO, W_pad), jnp.float32),   # channel 0 + channel 1
        ],
        compiler_params=pltpu.CompilerParams(
            dimension_semantics=("parallel", "parallel"),
            vmem_limit_bytes=vmem_limit,
        ),
    )(df_p, fg)

    l_fg_num = jnp.sum(partials[:, :, 0, 0])
    l_bg_num = jnp.sum(partials[:, :, 1, 0])
    fg_pix = jnp.sum(partials[:, :, 2, 0])

    total = float(N * C * D * F_)
    # TODO(synk): fg_count / bg_count are undefined in the reference forward();
    # counts are taken over the (N, C, D, F)-broadcast fg/bg masks (clamped >= 1).
    fg_count = jnp.maximum(float(C * D) * fg_pix, 1.0)
    bg_count = jnp.maximum(total - float(C * D) * fg_pix, 1.0)

    l_fg = l_fg_num / fg_count
    l_bg = l_bg_num / bg_count
    # TODO(synk): reference forward() has no return statement; we return both losses.
    return l_fg, l_bg


# ----------------------------------------------------------------------------
# Pure-JAX reference (direct transcription of the gather formulation) for a
# lightweight self-check.
# ----------------------------------------------------------------------------
def _reference_loss(df, targets, radius):
    N, C, H, W = df.shape
    ind_from, ind_to = get_indices_of_pairs(radius, (H, W))
    F_ = ind_from.shape[0]
    D = ind_to.shape[0] // F_
    pix = get_pixel_locations((H, W)).reshape(2, -1).astype(np.float32)
    lf = pix[:, ind_from][:, None, :]
    lt = pix[:, ind_to].reshape(2, D, F_)
    delta_hat = jnp.asarray((lt - lf)[None])
    df_flat = df.reshape(N, C, H * W)
    ff = jnp.take(df_flat, jnp.asarray(ind_from), axis=2)[:, :, None, :]
    ft = jnp.take(df_flat, jnp.asarray(ind_to), axis=2).reshape(N, C, D, F_)
    delta = ft - ff
    tgt_flat = targets.reshape(N, 1, H * W).astype(jnp.float32)
    fg = (jnp.take(tgt_flat, jnp.asarray(ind_from), axis=2) > 0.0).astype(jnp.float32)
    fg_b = jnp.broadcast_to(fg[:, :, None, :], delta.shape)
    bg_b = 1.0 - fg_b
    fg_count = jnp.maximum(jnp.sum(fg_b), 1.0)
    bg_count = jnp.maximum(jnp.sum(bg_b), 1.0)
    l_fg = jnp.sum(fg_b * jnp.abs(delta - delta_hat)) / fg_count
    l_bg = jnp.sum(bg_b * delta) / bg_count
    return l_fg, l_bg


if __name__ == "__main__":
    key = jax.random.PRNGKey(0)
    k_df, k_bd, k_tgt = jax.random.split(key, 3)

    N, C, H, W = 2, 2, 16, 16            # C=2 required (delta_hat has 2 channels)
    radius = 5
    df = jax.random.normal(k_df, (N, C, H, W), dtype=jnp.float32)
    bd = jax.random.normal(k_bd, (N, 1, H, W), dtype=jnp.float32)   # unused boundary map
    targets = (jax.random.uniform(k_tgt, (N, 1, H, W)) > 0.5).astype(jnp.float32)

    l_fg, l_bg = inter_pixel_relation_loss((df, bd), targets, pixel_radius=radius)
    jax.block_until_ready((l_fg, l_bg))

    # Self-check against the direct gather formulation.
    ref_fg, ref_bg = _reference_loss(df, targets, radius)
    np.testing.assert_allclose(np.asarray(l_fg), np.asarray(ref_fg), rtol=2e-3, atol=1e-4)
    np.testing.assert_allclose(np.asarray(l_bg), np.asarray(ref_bg), rtol=2e-3, atol=1e-4)

    print("KERNEL_OK")
</pallas_src>

<mosaic_0001>
module attributes {stable_mosaic.version = 11 : i64} {
  func.func @probe(%arg0: memref<8x128xf32, #tpu.memory_space<vmem>>, %arg1: memref<8x128xf32, #tpu.memory_space<vmem>>) attributes {dimension_semantics = [], scalar_prefetch = 0 : i64, scratch_operands = 0 : i64, tpu.core_type = #tpu.core_type<tc>} {
    %c0 = arith.constant 0 : index
    %c0_0 = arith.constant 0 : index
    %0 = vector.load %arg0[%c0, %c0_0] : memref<8x128xf32, #tpu.memory_space<vmem>>, vector<8x128xf32>
    %c1_i32 = arith.constant 1 : i32
    %1 = tpu.dynamic_rotate %0 by %c1_i32 dim 1 : vector<8x128xf32>, i32 -> vector<8x128xf32>
    %c0_1 = arith.constant 0 : index
    %c0_2 = arith.constant 0 : index
    %2 = vector.load %arg1[%c0_1, %c0_2] : memref<8x128xf32, #tpu.memory_space<vmem>>, vector<8x128xf32>
    tpu.vector_store %arg1[%c0_1, %c0_2], %1 {strides = array<i32>} : memref<8x128xf32, #tpu.memory_space<vmem>>, vector<8x128xf32>,
    return
  }
}

</mosaic_0001>

<llo_original>
// kernel: tpu_custom_call.1
$region0: #{tpu_custom_call.1}
  #allocation0 [shape = 'u32[]', space=smem, size = 0x4, offset = 0x4, fixed_abs, tag = 'smem constant byte address 0x4 - core index']
  #allocation1 [shape = 'u32[72,128]{1,0:T(1,128)}', space=vmem, size = 0x9000, scoped, tag = 'internal scratch']
  %s0 = inlined_call_operand.hbm [shape: f32[8,128], index: 0, kind: input, shape index: {}]
  %s1 = inlined_call_operand.hbm [shape: f32[8,128], index: 1, kind: output, shape index: {}]
  %s2 = sld [smem:[#allocation0]]
  $region18: #{tpu_custom_call.1} parent=0
    _
  %s4 = ssub.s32 1, %s2
  %s5 = scalar_select 0, %s4, %s2
  $region1: #{tpu_custom_call.1} parent=0
    #allocation2 [shape = 'u8[4096]{0}', space=vmem, size = 0x1000, scoped, tag = 'input window, operand 0, single buffered']
    #allocation3 [shape = 's32[1]{0}', space=sflag, size = 0x4, scoped, tag = 'scoped memory for tpu_custom_call.1']
    #allocation4 [shape = 's32[1]{0}', space=sflag, size = 0x4, scoped, tag = 'scoped memory for tpu_custom_call.1']
    #allocation5 [shape = 'u8[4096]{0}', space=vmem, size = 0x1000, scoped, tag = 'output window, operand 0, single buffered']
    %6 = vsyncpa [#allocation3], 0
    %7 = vsyncpa [#allocation4], 0
    // Predicated region
    $region2: #{tpu_custom_call.1} parent=1 // pred_check
      _
    $region3: #{tpu_custom_call.1} parent=1 // pred_check_branch
      %9 = sbr.rel (0) target = $region5
    $region4: #{tpu_custom_call.1} parent=1 // pred_region
      %11 = vsyncadd [#allocation3], 0
      %s13 = sshll.u32 %s0, 4
      %s14 = int_to_ptr.hbm [resolvable:$true] %s13
      %s15 = sshll.u32 [#allocation2], 4
      %s16 = int_to_ptr.vmem [resolvable:$true] %s15
      %18 = dma.hbm_to_vmem [thread:$0]  %s14, 128, %s16, [#allocation3]
    $region5: #{tpu_custom_call.1} parent=1 // pred_fallthru
      _
    // Predicated region
    $region6: #{tpu_custom_call.1} parent=1 // pred_check
      _
    $region7: #{tpu_custom_call.1} parent=1 // pred_check_branch
      %20 = sbr.rel (0) target = $region9
    $region8: #{tpu_custom_call.1} parent=1 // pred_region
      %22 = dma.done [#allocation3], 128
    $region9: #{tpu_custom_call.1} parent=1 // pred_fallthru
      _
    %v23 = vld [vmem:[#allocation2] sm:$0xff]
    %24 = vrot.lane.b32.xlu0 %v23, 1
    %v25 = vpop.permute.xlu0 %24
    %26 = vst [vmem:[#allocation5] sm:$0xff] %v25
    // Predicated region
    $region10: #{tpu_custom_call.1} parent=1 // pred_check
      _
    $region11: #{tpu_custom_call.1} parent=1 // pred_check_branch
      %28 = sbr.rel (0) target = $region13
    $region12: #{tpu_custom_call.1} parent=1 // pred_region
      %30 = vsyncadd [#allocation4], 0
      %s32 = sshll.u32 [#allocation5], 4
      %s33 = int_to_ptr.vmem [resolvable:$true] %s32
      %s34 = sshll.u32 %s1, 4
      %s35 = int_to_ptr.hbm [resolvable:$true] %s34
      %37 = dma.vmem_to_hbm [thread:$0]  %s33, 128, %s35, [#allocation4]
    $region13: #{tpu_custom_call.1} parent=1 // pred_fallthru
      _
    // Predicated region
    $region14: #{tpu_custom_call.1} parent=1 // pred_check
      _
    $region15: #{tpu_custom_call.1} parent=1 // pred_check_branch
      %39 = sbr.rel (0) target = $region17
    $region16: #{tpu_custom_call.1} parent=1 // pred_region
      %41 = dma.done [#allocation4], 128
    $region17: #{tpu_custom_call.1} parent=1 // pred_fallthru
      _
    %42 = vsyncpa [#allocation3], 1
    %43 = vsyncpa [#allocation4], 1

</llo_original>
